<compile_context>
chip_gen: v7x
topology: tpu7x:2x2x1
jax: 0.10.0
libtpu: 0.0.40
codegen_flags: <defaults>
</compile_context>

<pallas_src>
import jax
import jax.numpy as jnp
from jax.experimental import pallas as pl
from jax.experimental.pallas import tpu as pltpu


def _multitask_loss_kernel(
    coeff_ref,    # SMEM (2,)  f32: [w_energy / n_energy_elems, w_forces / n_forces_elems]
    e_pred_ref,   # SMEM (B,)  f32: energy predictions
    e_tgt_ref,    # SMEM (B,)  f32: energy targets
    inv_n_ref,    # SMEM (B,)  f32: exact host-computed 1 / n_atoms
    f_pred_ref,   # VMEM (N,3) f32: force predictions
    f_tgt_ref,    # VMEM (N,3) f32: force targets
    out_ref,      # SMEM (1,1) f32: weighted multitask loss
):
    # ---- forces task: plain MSE numerator on the vector path (one XLU reduce).
    f_diff = f_pred_ref[...] - f_tgt_ref[...]
    f_sse = jnp.sum(f_diff * f_diff)

    # ---- energy task: scale_per_atom -> MSE(pred / n, tgt / n).
    # B is tiny and static, so this runs as fully unrolled scalar (SMEM) ops on
    # the otherwise-idle scalar unit; the f32 divide is pre-folded into inv_n.
    num_systems = e_pred_ref.shape[0]
    e_sse = jnp.float32(0.0)
    for i in range(num_systems):
        d = (e_pred_ref[i] - e_tgt_ref[i]) * inv_n_ref[i]
        e_sse = e_sse + d * d

    # torch.sum(hstack([e_loss, f_loss]) * weights), with weights and the MSE
    # denominators pre-folded into coeff on the host.
    out_ref[0, 0] = coeff_ref[0] * e_sse + coeff_ref[1] * f_sse


def multitask_loss(inputs, targets, weights):
    """Pallas implementation of MultitaskLoss.forward (default config)."""
    energy_pred = inputs["energy"].astype(jnp.float32)
    energy_tgt = targets["energy"].astype(jnp.float32)
    forces_pred = inputs["forces"].astype(jnp.float32)
    forces_tgt = targets["forces"].astype(jnp.float32)
    n_atoms = targets["n_atoms"].astype(jnp.float32)

    n_e = energy_pred.size   # static Python ints (MSE denominators)
    n_f = forces_pred.size

    # Exact reciprocal on the host: only B elements, keeps the kernel divide-free.
    inv_n = 1.0 / jnp.broadcast_to(n_atoms, energy_pred.shape)

    # Fold task weights and MSE denominators into two scalar coefficients.
    weights = jnp.asarray(weights, jnp.float32)
    coeff = weights / jnp.array([n_e, n_f], jnp.float32)

    # Forces as a single full-block 2-D VMEM tile (no padding, no slab).
    f_pred2 = forces_pred.reshape(-1, forces_pred.shape[-1])
    f_tgt2 = forces_tgt.reshape(-1, forces_tgt.shape[-1])
    # TODO(synk): for systems too large for one VMEM tile, switch to a 1-D grid
    # over lane-dense force blocks with an accumulator (pl.when init/finalize).

    flops = 4 * (n_e + n_f) + 8
    bytes_accessed = 4 * (2 * n_f + 3 * n_e + 2 + 1)

    out = pl.pallas_call(
        _multitask_loss_kernel,
        out_shape=jax.ShapeDtypeStruct((1, 1), jnp.float32),
        in_specs=[
            pl.BlockSpec(memory_space=pltpu.MemorySpace.SMEM),   # coeff
            pl.BlockSpec(memory_space=pltpu.MemorySpace.SMEM),   # energy_pred
            pl.BlockSpec(memory_space=pltpu.MemorySpace.SMEM),   # energy_tgt
            pl.BlockSpec(memory_space=pltpu.MemorySpace.SMEM),   # 1 / n_atoms
            pl.BlockSpec(memory_space=pltpu.MemorySpace.VMEM),   # forces_pred
            pl.BlockSpec(memory_space=pltpu.MemorySpace.VMEM),   # forces_tgt
        ],
        out_specs=pl.BlockSpec(memory_space=pltpu.MemorySpace.SMEM),
        cost_estimate=pl.CostEstimate(
            flops=flops, transcendentals=0, bytes_accessed=bytes_accessed
        ),
    )(coeff, energy_pred, energy_tgt, inv_n, f_pred2, f_tgt2)
    return out[0, 0]


def multitask_loss_ref(inputs, targets, weights):
    """Pure-JAX reference mirroring the PyTorch module."""
    n_atoms = targets["n_atoms"].astype(jnp.float32)
    e_loss = jnp.mean(
        (inputs["energy"] / n_atoms - targets["energy"] / n_atoms) ** 2
    )
    f_loss = jnp.mean((inputs["forces"] - targets["forces"]) ** 2)
    return jnp.sum(jnp.stack([e_loss, f_loss]) * weights)


if __name__ == "__main__":
    key = jax.random.PRNGKey(0)
    k1, k2, k3, k4 = jax.random.split(key, 4)

    B = 2          # batch of systems
    N_ATOMS = 16   # total atoms across the batch

    inputs = {
        "energy": jax.random.normal(k1, (B,), jnp.float32) * 10.0,
        "forces": jax.random.normal(k2, (N_ATOMS, 3), jnp.float32),
    }
    targets = {
        "energy": jax.random.normal(k3, (B,), jnp.float32) * 10.0,
        "forces": jax.random.normal(k4, (N_ATOMS, 3), jnp.float32),
        "n_atoms": jnp.array([8.0, 8.0], jnp.float32),
    }
    # default __init__: weights = torch.ones(len(tasks)), adaptive_weights=False
    weights = jnp.ones((2,), jnp.float32)

    loss = multitask_loss(inputs, targets, weights)
    jax.block_until_ready(loss)

    ref = multitask_loss_ref(inputs, targets, weights)
    assert jnp.allclose(loss, ref, rtol=1e-5, atol=1e-5), (loss, ref)

    # TODO(synk): adaptive_weights=True branch (log-variance weighting) is not
    # exercised by the default config and is left out of the kernel.
    print("KERNEL_OK")
</pallas_src>

<mosaic_0001>
module attributes {stable_mosaic.version = 11 : i64} {
  func.func @_multitask_loss_kernel(%arg0: memref<2xf32, #tpu.memory_space<smem>>, %arg1: memref<2xf32, #tpu.memory_space<smem>>, %arg2: memref<2xf32, #tpu.memory_space<smem>>, %arg3: memref<2xf32, #tpu.memory_space<smem>>, %arg4: memref<16x3xf32, #tpu.memory_space<vmem>>, %arg5: memref<16x3xf32, #tpu.memory_space<vmem>>, %arg6: memref<1x1xf32, #tpu.memory_space<smem>>) attributes {dimension_semantics = [], scalar_prefetch = 0 : i64, scratch_operands = 0 : i64, tpu.core_type = #tpu.core_type<tc>} {
    %c0 = arith.constant 0 : index
    %c0_0 = arith.constant 0 : index
    %0 = vector.load %arg4[%c0, %c0_0] : memref<16x3xf32, #tpu.memory_space<vmem>>, vector<16x3xf32>
    %c0_1 = arith.constant 0 : index
    %c0_2 = arith.constant 0 : index
    %1 = vector.load %arg5[%c0_1, %c0_2] : memref<16x3xf32, #tpu.memory_space<vmem>>, vector<16x3xf32>
    %2 = arith.subf %0, %1 : vector<16x3xf32>
    %3 = arith.mulf %2, %2 : vector<16x3xf32>
    %4 = vector.shape_cast %3 : vector<16x3xf32> to vector<1x16x3xf32>
    %cst = arith.constant dense<0.000000e+00> : vector<1xf32>
    %5 = vector.multi_reduction <add>, %4, %cst [1, 2] : vector<1x16x3xf32> to vector<1xf32>
    %6 = vector.shape_cast %5 : vector<1xf32> to vector<1x1x1xf32>
    %7 = vector.extract %6[0, 0, 0] : f32 from vector<1x1x1xf32>
    %c0_3 = arith.constant 0 : index
    %8 = memref.load %arg1[%c0_3] : memref<2xf32, #tpu.memory_space<smem>>
    %c0_4 = arith.constant 0 : index
    %9 = memref.load %arg2[%c0_4] : memref<2xf32, #tpu.memory_space<smem>>
    %10 = arith.subf %8, %9 : f32
    %c0_5 = arith.constant 0 : index
    %11 = memref.load %arg3[%c0_5] : memref<2xf32, #tpu.memory_space<smem>>
    %12 = arith.mulf %10, %11 : f32
    %13 = arith.mulf %12, %12 : f32
    %cst_6 = arith.constant 0.000000e+00 : f32
    %14 = arith.addf %cst_6, %13 : f32
    %c1 = arith.constant 1 : index
    %15 = memref.load %arg1[%c1] : memref<2xf32, #tpu.memory_space<smem>>
    %c1_7 = arith.constant 1 : index
    %16 = memref.load %arg2[%c1_7] : memref<2xf32, #tpu.memory_space<smem>>
    %17 = arith.subf %15, %16 : f32
    %c1_8 = arith.constant 1 : index
    %18 = memref.load %arg3[%c1_8] : memref<2xf32, #tpu.memory_space<smem>>
    %19 = arith.mulf %17, %18 : f32
    %20 = arith.mulf %19, %19 : f32
    %21 = arith.addf %14, %20 : f32
    %c0_9 = arith.constant 0 : index
    %22 = memref.load %arg0[%c0_9] : memref<2xf32, #tpu.memory_space<smem>>
    %23 = arith.mulf %22, %21 : f32
    %c1_10 = arith.constant 1 : index
    %24 = memref.load %arg0[%c1_10] : memref<2xf32, #tpu.memory_space<smem>>
    %25 = arith.mulf %24, %7 : f32
    %26 = arith.addf %23, %25 : f32
    %c0_11 = arith.constant 0 : index
    %c0_12 = arith.constant 0 : index
    %27 = memref.load %arg6[%c0_11, %c0_12] : memref<1x1xf32, #tpu.memory_space<smem>>
    memref.store %26, %arg6[%c0_11, %c0_12] : memref<1x1xf32, #tpu.memory_space<smem>>
    return
  }
}

</mosaic_0001>

<llo_original>
// kernel: tpu_custom_call.1
$region0: #{tpu_custom_call.1}
  #allocation0 [shape = 'u32[]', space=smem, size = 0x4, offset = 0x4, fixed_abs, tag = 'smem constant byte address 0x4 - core index']
  #allocation1 [shape = 'u32[144,128]{1,0:T(1,128)}', space=vmem, size = 0x12000, scoped, tag = 'internal scratch']
  %s0 = inlined_call_operand.vmem [shape: f32[2], index: 0, kind: input, shape index: {}]
  %s1 = inlined_call_operand.vmem [shape: f32[2], index: 1, kind: input, shape index: {}]
  %s2 = inlined_call_operand.vmem [shape: f32[2], index: 2, kind: input, shape index: {}]
  %s3 = inlined_call_operand.vmem [shape: f32[2], index: 3, kind: input, shape index: {}]
  %s4 = inlined_call_operand.vmem [shape: f32[16,3], index: 4, kind: input, shape index: {}]
  %s5 = inlined_call_operand.vmem [shape: f32[16,3], index: 5, kind: input, shape index: {}]
  %s6 = inlined_call_operand.hbm [shape: f32[1,1], index: 6, kind: output, shape index: {}]
  %s7 = sld [smem:[#allocation0]]
  $region50: #{tpu_custom_call.1} parent=0
    _
  %s9 = ssub.s32 1, %s7
  %s10 = scalar_select 0, %s9, %s7
  $region1: #{tpu_custom_call.1} parent=0
    #allocation2 [shape = 'u8[512]{0}', space=smem, size = 0x200, scoped, tag = 'input window, operand 0, single buffered']
    #allocation3 [shape = 's32[1]{0}', space=sflag, size = 0x4, scoped, tag = 'scoped memory for tpu_custom_call.1']
    #allocation4 [shape = 's32[1]{0}', space=sflag, size = 0x4, scoped, tag = 'scoped memory for tpu_custom_call.1']
    #allocation5 [shape = 'u8[512]{0}', space=smem, size = 0x200, scoped, tag = 'input window, operand 1, single buffered']
    #allocation6 [shape = 's32[1]{0}', space=sflag, size = 0x4, scoped, tag = 'scoped memory for tpu_custom_call.1']
    #allocation7 [shape = 'u8[512]{0}', space=smem, size = 0x200, scoped, tag = 'input window, operand 2, single buffered']
    #allocation8 [shape = 'u8[512]{0}', space=smem, size = 0x200, scoped, tag = 'input window, operand 3, single buffered']
    #allocation9 [shape = 's32[1]{0}', space=sflag, size = 0x4, scoped, tag = 'scoped memory for tpu_custom_call.1']
    #allocation10 [shape = 'u8[512]{0}', space=smem, size = 0x200, scoped, tag = 'output window, operand 0, single buffered']
    %11 = vsyncpa [#allocation4], 0
    %12 = vsyncpa [#allocation6], 0
    %13 = vsyncpa [#allocation9], 0
    %14 = vsyncpa [#allocation3], 0
    // Predicated region
    $region2: #{tpu_custom_call.1} parent=1 // pred_check
      _
    $region3: #{tpu_custom_call.1} parent=1 // pred_check_branch
      %16 = sbr.rel (0) target = $region5
    $region4: #{tpu_custom_call.1} parent=1 // pred_region
      %s18 = ssub.s32 16, 16
      %19 = vsyncadd [#allocation4], %s18
      %s21 = sshll.u32 %s0, 4
      %s22 = int_to_ptr.vmem [resolvable:$true] %s21
      %24 = dma.vmem_to_smem %s22, 16, [#allocation2], [#allocation4]
    $region5: #{tpu_custom_call.1} parent=1 // pred_fallthru
      _
    // Predicated region
    $region6: #{tpu_custom_call.1} parent=1 // pred_check
      _
    $region7: #{tpu_custom_call.1} parent=1 // pred_check_branch
      %26 = sbr.rel (0) target = $region9
    $region8: #{tpu_custom_call.1} parent=1 // pred_region
      %s28 = ssub.s32 16, 16
      %29 = vsyncadd [#allocation6], %s28
      %s31 = sshll.u32 %s1, 4
      %s32 = int_to_ptr.vmem [resolvable:$true] %s31
      %34 = dma.vmem_to_smem %s32, 16, [#allocation5], [#allocation6]
    $region9: #{tpu_custom_call.1} parent=1 // pred_fallthru
      _
    // Predicated region
    $region10: #{tpu_custom_call.1} parent=1 // pred_check
      _
    $region11: #{tpu_custom_call.1} parent=1 // pred_check_branch
      %36 = sbr.rel (0) target = $region13
    $region12: #{tpu_custom_call.1} parent=1 // pred_region
      %s38 = ssub.s32 16, 16
      %39 = vsyncadd [#allocation6], %s38
      %s41 = sshll.u32 %s2, 4
      %s42 = int_to_ptr.vmem [resolvable:$true] %s41
      %44 = dma.vmem_to_smem %s42, 16, [#allocation7], [#allocation6]
    $region13: #{tpu_custom_call.1} parent=1 // pred_fallthru
      _
    // Predicated region
    $region14: #{tpu_custom_call.1} parent=1 // pred_check
      _
    $region15: #{tpu_custom_call.1} parent=1 // pred_check_branch
      %46 = sbr.rel (0) target = $region17
    $region16: #{tpu_custom_call.1} parent=1 // pred_region
      %s48 = ssub.s32 16, 16
      %49 = vsyncadd [#allocation9], %s48
      %s51 = sshll.u32 %s3, 4
      %s52 = int_to_ptr.vmem [resolvable:$true] %s51
      %54 = dma.vmem_to_smem %s52, 16, [#allocation8], [#allocation9]
    $region17: #{tpu_custom_call.1} parent=1 // pred_fallthru
      _
    // Predicated region
    $region18: #{tpu_custom_call.1} parent=1 // pred_check
      _
    $region19: #{tpu_custom_call.1} parent=1 // pred_check_branch
      %56 = sbr.rel (0) target = $region21
    $region20: #{tpu_custom_call.1} parent=1 // pred_region
      _
    $region21: #{tpu_custom_call.1} parent=1 // pred_fallthru
      _
    // Predicated region
    $region22: #{tpu_custom_call.1} parent=1 // pred_check
      _
    $region23: #{tpu_custom_call.1} parent=1 // pred_check_branch
      %58 = sbr.rel (0) target = $region25
    $region24: #{tpu_custom_call.1} parent=1 // pred_region
      _
    $region25: #{tpu_custom_call.1} parent=1 // pred_fallthru
      _
    // Predicated region
    $region26: #{tpu_custom_call.1} parent=1 // pred_check
      _
    $region27: #{tpu_custom_call.1} parent=1 // pred_check_branch
      %60 = sbr.rel (0) target = $region29
    $region28: #{tpu_custom_call.1} parent=1 // pred_region
      %61 = dma.done [#allocation4], 16
    $region29: #{tpu_custom_call.1} parent=1 // pred_fallthru
      _
    // Predicated region
    $region30: #{tpu_custom_call.1} parent=1 // pred_check
      _
    $region31: #{tpu_custom_call.1} parent=1 // pred_check_branch
      %63 = sbr.rel (0) target = $region33
    $region32: #{tpu_custom_call.1} parent=1 // pred_region
      %64 = dma.done [#allocation6], 16
    $region33: #{tpu_custom_call.1} parent=1 // pred_fallthru
      _
    // Predicated region
    $region34: #{tpu_custom_call.1} parent=1 // pred_check
      _
    $region35: #{tpu_custom_call.1} parent=1 // pred_check_branch
      %66 = sbr.rel (0) target = $region37
    $region36: #{tpu_custom_call.1} parent=1 // pred_region
      %67 = dma.done [#allocation6], 16
    $region37: #{tpu_custom_call.1} parent=1 // pred_fallthru
      _
    // Predicated region
    $region38: #{tpu_custom_call.1} parent=1 // pred_check
      _
    $region39: #{tpu_custom_call.1} parent=1 // pred_check_branch
      %69 = sbr.rel (0) target = $region41
    $region40: #{tpu_custom_call.1} parent=1 // pred_region
      %70 = dma.done [#allocation9], 16
    $region41: #{tpu_custom_call.1} parent=1 // pred_fallthru
      _
    %71 = sfence
    %v72 = vld [vmem:[%s4] sm:$0xff]
    %v73 = vld [vmem:[%s4 + $0x8] sm:$0xff]
    %v74 = vld [vmem:[%s5] sm:$0xff]
    %v75 = vld [vmem:[%s5 + $0x8] sm:$0xff]
    %v76 = vsub.f32 %v72, %v74
    %v77 = vsub.f32 %v73, %v75
    %v78 = vmul.f32 %v76, %v76
    %v79 = vmul.f32 %v77, %v77
    %vm80 = vcmask 23552
    %v81 = vsel %vm80, %v78, 0.0
    %v82 = vsel %vm80, %v79, 0.0
    %v83 = vadd.f32 %v81, %v82
    %84 = vadd.xlane.f32.xlu0 %v83
    %v85 = vpop.xlane.xlu0 %84
    %v86 = vrot.slane %v85, 4
    %v87 = vadd.f32 %v85, %v86
    %v88 = vrot.slane %v87, 2
    %v89 = vadd.f32 %v87, %v88
    %v90 = vrot.slane %v89, 1
    %v91 = vadd.f32 %v89, %v90
    %s92 = vtos %v91
    %s93 = sld [smem:[#allocation5]]
    %s94 = sld [smem:[#allocation7]]
    %s95 = ssub.f32 %s93, %s94
    %s96 = sld [smem:[#allocation8]]
    %s97 = smul.f32 %s95, %s96
    %s98 = smul.f32 %s97, %s97
    %s99 = sadd.f32 %s98, 0.0
    %s100 = sld [smem:[#allocation5 + $0x1]]
    %s101 = sld [smem:[#allocation7 + $0x1]]
    %s102 = ssub.f32 %s100, %s101
    %s103 = sld [smem:[#allocation8 + $0x1]]
    %s104 = smul.f32 %s102, %s103
    %s105 = smul.f32 %s104, %s104
    %s106 = sadd.f32 %s99, %s105
    %s107 = sld [smem:[#allocation2]]
    %s108 = smul.f32 %s107, %s106
    %s109 = sld [smem:[#allocation2 + $0x1]]
    %s110 = smul.f32 %s109, %s92
    %s111 = sadd.f32 %s108, %s110
    %s112 = scalar_lea.smem [#allocation10], 0
    %113 = sst [smem:[%s112]] %s111
    // Predicated region
    $region42: #{tpu_custom_call.1} parent=1 // pred_check
      _
    $region43: #{tpu_custom_call.1} parent=1 // pred_check_branch
      %115 = sbr.rel (0) target = $region45
    $region44: #{tpu_custom_call.1} parent=1 // pred_region
      %s117 = ssub.s32 16, 16
      %118 = vsyncadd [#allocation3], %s117
      %121 = dma.smem_to_hbm [#allocation10], 16, %s6, [#allocation3]
    $region45: #{tpu_custom_call.1} parent=1 // pred_fallthru
      _
    // Predicated region
    $region46: #{tpu_custom_call.1} parent=1 // pred_check
      _
    $region47: #{tpu_custom_call.1} parent=1 // pred_check_branch
      %123 = sbr.rel (0) target = $region49
    $region48: #{tpu_custom_call.1} parent=1 // pred_region
      %124 = dma.done [#allocation3], 16
    $region49: #{tpu_custom_call.1} parent=1 // pred_fallthru
      _
    %125 = sfence
    %126 = vsyncpa [#allocation3], 1
    %127 = vsyncpa [#allocation4], 1
    %128 = vsyncpa [#allocation6], 1
    %129 = vsyncpa [#allocation9], 1

</llo_original>
